<compile_context>
chip_gen: v6e
topology: v6e:2x2x1
jax: 0.10.0
libtpu: 0.0.40
codegen_flags: <defaults>
</compile_context>

<pallas_src>
import functools

import jax
import jax.numpy as jnp
from jax import lax
from jax.experimental import pallas as pl
from jax.experimental.pallas import tpu as pltpu


def _barlow_kernel(fv_ref, ft_ref, loss_ref, c_acc_ref, *,
                   n_total, col_tile, cast_bf16):
    """Grid step (j, k): accumulate a (D, tn) slab of feat_V.T @ feat_T over
    batch tiles k; on the last k step reduce this column block to a partial
    scalar loss."""
    j = pl.program_id(0)
    k = pl.program_id(1)

    @pl.when(k == 0)
    def _init():
        c_acc_ref[...] = jnp.zeros_like(c_acc_ref)

    fv = fv_ref[...]                       # (tH, D)
    ft = ft_ref[...]                       # (tH, tn)
    if cast_bf16:
        fv = fv.astype(jnp.bfloat16)
        ft = ft.astype(jnp.bfloat16)

    # c_block += fv.T @ ft  (contract the batch-tile axis), f32 MXU accumulate.
    c_acc_ref[...] += lax.dot_general(
        fv, ft,
        dimension_numbers=(((0,), (0,)), ((), ())),
        preferred_element_type=jnp.float32,
    )

    @pl.when(k == pl.num_programs(1) - 1)
    def _finish():
        c = c_acc_ref[...]                       # (D, tn), NOT yet scaled by 1/N
        inv_n = jnp.float32(1.0 / n_total)

        c2 = c * c
        rows = lax.broadcasted_iota(jnp.int32, c.shape, 0)
        cols = lax.broadcasted_iota(jnp.int32, c.shape, 1)
        diag_mask = rows == (cols + j * col_tile)   # global diag inside block j
        zeros = jnp.zeros_like(c)

        sum_c2 = jnp.sum(c2)
        sum_d2 = jnp.sum(jnp.where(diag_mask, c2, zeros))
        sum_d = jnp.sum(jnp.where(diag_mask, c, zeros))

        # Per-column-block partial of
        #   loss = (sum((diag-1)^2) + 0.05*(sum(c^2) - sum(diag^2))) / 2048
        # with the 1/N scaling folded into the scalars.
        partial = (0.05 * inv_n * inv_n * sum_c2
                   + 0.95 * inv_n * inv_n * sum_d2
                   - 2.0 * inv_n * sum_d
                   + jnp.float32(col_tile)) / 2048.0

        # Lane-aligned (1, 128) output row: partial at lane 0, zeros elsewhere,
        # so the wrapper can just jnp.sum the whole output.
        lane = lax.broadcasted_iota(jnp.int32, (1, 128), 1)
        loss_ref[...] = jnp.where(lane == 0, partial, jnp.float32(0.0))


def _round_up(x, m):
    return ((x + m - 1) // m) * m


def _pick_col_tile(d):
    """Column tile of the cross-correlation accumulator: must divide D and be
    a multiple of 128, or be the full D."""
    if d % 128 != 0 or d <= 512:
        return d
    acc_budget = 8 * 1024 * 1024          # f32 (D, tn) accumulator budget
    for cand in (2048, 1024, 512, 256, 128):
        if cand < d and d % cand == 0 and d * cand * 4 <= acc_budget:
            return cand
    return d
    # TODO(synk): row-tile the accumulator too (second parallel axis) when D is
    # both huge and not a multiple of 128 (untiled (D, D) acc would not fit).


def _pick_row_tile(half, d, tn, itemsize):
    """Largest row tile (cap 1024, multiple of 8) whose double-buffered input
    tiles (2 x (tH, D) + 2 x (tH, tn)) fit a ~12 MiB VMEM budget."""
    budget = 12 * 1024 * 1024
    per_row = 2 * (d + tn) * itemsize
    max_rows = max(8, min(1024, budget // per_row) // 8 * 8)
    if half <= max_rows:
        return _round_up(half, 8)
    for cand in (1024, 512, 256, 128, 64, 32, 16, 8):
        if cand <= max_rows:
            return cand
    return 8


def barlow_twins_loss(inputs, targets=None, margin=0.3, cast_to_bf16=False):
    """JAX/Pallas equivalent of BarlowTwins_loss.forward.

    `targets` and `margin` are unused by the PyTorch forward pass (kept for
    signature parity).  `cast_to_bf16=True` feeds the MXU in bf16 (f32
    accumulation) for ~2-3x matmul throughput at slightly different numerics.
    """
    n, d = inputs.shape
    assert n % 2 == 0, "batch must be even (chunked into two halves)"
    half = n // 2

    itemsize = jnp.dtype(inputs.dtype).itemsize
    tn = _pick_col_tile(d)
    n_j = d // tn
    th = _pick_row_tile(half, d, tn, itemsize)
    padded_half = _round_up(half, th)
    n_k = padded_half // th

    kernel = functools.partial(
        _barlow_kernel, n_total=float(n), col_tile=tn, cast_bf16=cast_to_bf16)

    if padded_half == half:
        # Main path: both halves read from the single `inputs` buffer purely
        # via BlockSpec index_map offsets (feat_T rows start at block n_k).
        in_specs = [
            pl.BlockSpec((th, d), lambda j, k: (k, 0)),                  # feat_V
            pl.BlockSpec((th, tn), lambda j, k, off=n_k: (k + off, j)),  # feat_T
        ]
        operands = (inputs, inputs)
    else:
        # Awkward batch size: zero-pad each half up to a multiple of the row
        # tile.  Zero rows contribute nothing to feat_V.T @ feat_T; n_total
        # stays the original N.
        pad = padded_half - half
        fv_arr = jnp.pad(inputs[:half], ((0, pad), (0, 0)))
        ft_arr = jnp.pad(inputs[half:], ((0, pad), (0, 0)))
        in_specs = [
            pl.BlockSpec((th, d), lambda j, k: (k, 0)),
            pl.BlockSpec((th, tn), lambda j, k: (k, j)),
        ]
        operands = (fv_arr, ft_arr)

    # VMEM budget: double-buffered input tiles + (D, tn) f32 accumulator +
    # output rows, with 1.5x headroom, clamped to [16 MiB, 48 MiB] (v7x-safe).
    vmem_needed = (2 * th * d * itemsize          # feat_V tile, 2 buffers
                   + 2 * th * tn * itemsize       # feat_T tile, 2 buffers
                   + d * tn * 4                   # f32 accumulator
                   + 2 * 128 * n_j * 4)           # output rows
    vmem_limit = min(max(int(vmem_needed * 1.5) + (1 << 20), 16 * 1024 * 1024),
                     48 * 1024 * 1024)

    out = pl.pallas_call(
        kernel,
        out_shape=jax.ShapeDtypeStruct((1, 128 * n_j), jnp.float32),
        grid=(n_j, n_k),
        in_specs=in_specs,
        out_specs=pl.BlockSpec((1, 128), lambda j, k: (0, j)),
        scratch_shapes=[
            pltpu.VMEM((d, tn), jnp.float32),     # c column-block accumulator
        ],
        compiler_params=pltpu.CompilerParams(
            dimension_semantics=("parallel", "arbitrary"),
            vmem_limit_bytes=vmem_limit,
        ),
    )(*operands)
    # Non-lane-0 entries are exactly zero; sum of per-block partials = loss.
    return jnp.sum(out)


def _reference(inputs):
    # Pure-JAX reference mirroring the PyTorch forward pass.
    n = inputs.shape[0]
    half = n // 2
    fv, ft = inputs[:half], inputs[half:]
    c = (fv.T @ ft) / n
    on_diag = jnp.sum((jnp.diag(c) - 1.0) ** 2)
    off_diag = jnp.sum(c ** 2) - jnp.sum(jnp.diag(c) ** 2)
    return (on_diag + 0.05 * off_diag) / 2048.0


if __name__ == "__main__":
    key = jax.random.PRNGKey(0)
    # Small but TPU-tile-friendly shapes: batch=32 (two views of 16), feat=128.
    N, D = 32, 128
    inputs = jax.random.normal(key, (N, D), dtype=jnp.float32)
    targets = jnp.zeros((N,), dtype=jnp.int32)  # unused by the forward pass

    loss = barlow_twins_loss(inputs, targets)
    jax.block_until_ready(loss)

    ref = _reference(inputs)
    assert jnp.allclose(loss, ref, atol=1e-5, rtol=1e-4), (loss, ref)
    print("KERNEL_OK")
</pallas_src>

<mosaic_0001>
module attributes {stable_mosaic.version = 11 : i64} {
  func.func @_barlow_kernel(%arg0: i32, %arg1: i32, %arg2: memref<16x128xf32, #tpu.memory_space<vmem>>, %arg3: memref<16x128xf32, #tpu.memory_space<vmem>>, %arg4: memref<1x128xf32, #tpu.memory_space<vmem>>, %arg5: memref<128x128xf32, #tpu.memory_space<vmem>>) attributes {dimension_semantics = [#tpu.dimension_semantics<parallel>, #tpu.dimension_semantics<arbitrary>], iteration_bounds = array<i64: 1, 1>, scalar_prefetch = 0 : i64, scratch_operands = 1 : i64, tpu.core_type = #tpu.core_type<tc>, window_params = [{transform_indices = @transform_0, window_bounds = array<i64: 16, 128>}, {transform_indices = @transform_1, window_bounds = array<i64: 16, 128>}, {transform_indices = @transform_2, window_bounds = array<i64: 1, 128>}]} {
    %c0_i32 = arith.constant 0 : i32
    %0 = arith.cmpi eq, %arg1, %c0_i32 : i32
    %1 = arith.extui %0 : i1 to i32
    %c0_i32_0 = arith.constant 0 : i32
    %2 = arith.cmpi ne, %1, %c0_i32_0 : i32
    scf.if %2 {
      %cst_10 = arith.constant 0.000000e+00 : f32
      %12 = vector.broadcast %cst_10 : f32 to vector<128x128xf32>
      %c0_11 = arith.constant 0 : index
      %c0_12 = arith.constant 0 : index
      %13 = vector.load %arg5[%c0_11, %c0_12] : memref<128x128xf32, #tpu.memory_space<vmem>>, vector<128x128xf32>
      tpu.vector_store %arg5[%c0_11, %c0_12], %12 {strides = array<i32>} : memref<128x128xf32, #tpu.memory_space<vmem>>, vector<128x128xf32>,
    } else {
    }
    %c0 = arith.constant 0 : index
    %c0_1 = arith.constant 0 : index
    %3 = vector.load %arg2[%c0, %c0_1] : memref<16x128xf32, #tpu.memory_space<vmem>>, vector<16x128xf32>
    %c0_2 = arith.constant 0 : index
    %c0_3 = arith.constant 0 : index
    %4 = vector.load %arg3[%c0_2, %c0_3] : memref<16x128xf32, #tpu.memory_space<vmem>>, vector<16x128xf32>
    %c0_4 = arith.constant 0 : index
    %c0_5 = arith.constant 0 : index
    %5 = vector.load %arg5[%c0_4, %c0_5] : memref<128x128xf32, #tpu.memory_space<vmem>>, vector<128x128xf32>
    %cst = arith.constant dense<0.000000e+00> : vector<128x128xf32>
    %6 = tpu.matmul %3, %4, %cst {dimension_numbers = #tpu.dot_dimension_numbers<[0], [0], [1], [1], [0, 1, 1, 1], [], []>} : vector<16x128xf32>, vector<16x128xf32>, vector<128x128xf32> -> vector<128x128xf32>
    %7 = arith.addf %5, %6 : vector<128x128xf32>
    %c0_6 = arith.constant 0 : index
    %c0_7 = arith.constant 0 : index
    %8 = vector.load %arg5[%c0_6, %c0_7] : memref<128x128xf32, #tpu.memory_space<vmem>>, vector<128x128xf32>
    tpu.vector_store %arg5[%c0_6, %c0_7], %7 {strides = array<i32>} : memref<128x128xf32, #tpu.memory_space<vmem>>, vector<128x128xf32>,
    %c0_i32_8 = arith.constant 0 : i32
    %9 = arith.cmpi eq, %arg1, %c0_i32_8 : i32
    %10 = arith.extui %9 : i1 to i32
    %c0_i32_9 = arith.constant 0 : i32
    %11 = arith.cmpi ne, %10, %c0_i32_9 : i32
    scf.if %11 {
      %c0_10 = arith.constant 0 : index
      %c0_11 = arith.constant 0 : index
      %12 = vector.load %arg5[%c0_10, %c0_11] : memref<128x128xf32, #tpu.memory_space<vmem>>, vector<128x128xf32>
      %13 = arith.mulf %12, %12 : vector<128x128xf32>
      %14 = tpu.iota {dimensions = array<i32: 0>} : vector<128x128xi32>
      %15 = tpu.iota {dimensions = array<i32: 1>} : vector<128x128xi32>
      %c128_i32 = arith.constant 128 : i32
      %16 = arith.muli %arg0, %c128_i32 : i32
      %17 = vector.broadcast %16 : i32 to vector<128x128xi32>
      %18 = arith.addi %15, %17 : vector<128x128xi32>
      %19 = arith.cmpi eq, %14, %18 : vector<128x128xi32>
      %cst_12 = arith.constant 0.000000e+00 : f32
      %20 = vector.broadcast %cst_12 : f32 to vector<128x128xf32>
      %21 = vector.shape_cast %13 : vector<128x128xf32> to vector<1x128x128xf32>
      %cst_13 = arith.constant dense<0.000000e+00> : vector<1xf32>
      %22 = vector.multi_reduction <add>, %21, %cst_13 [1, 2] : vector<1x128x128xf32> to vector<1xf32>
      %23 = vector.shape_cast %22 : vector<1xf32> to vector<1x1x1xf32>
      %24 = vector.extract %23[0, 0, 0] : f32 from vector<1x1x1xf32>
      %25 = arith.select %19, %13, %20 : vector<128x128xi1>, vector<128x128xf32>
      %26 = vector.shape_cast %25 : vector<128x128xf32> to vector<1x128x128xf32>
      %cst_14 = arith.constant dense<0.000000e+00> : vector<1xf32>
      %27 = vector.multi_reduction <add>, %26, %cst_14 [1, 2] : vector<1x128x128xf32> to vector<1xf32>
      %28 = vector.shape_cast %27 : vector<1xf32> to vector<1x1x1xf32>
      %29 = vector.extract %28[0, 0, 0] : f32 from vector<1x1x1xf32>
      %30 = arith.select %19, %12, %20 : vector<128x128xi1>, vector<128x128xf32>
      %31 = vector.shape_cast %30 : vector<128x128xf32> to vector<1x128x128xf32>
      %cst_15 = arith.constant dense<0.000000e+00> : vector<1xf32>
      %32 = vector.multi_reduction <add>, %31, %cst_15 [1, 2] : vector<1x128x128xf32> to vector<1xf32>
      %33 = vector.shape_cast %32 : vector<1xf32> to vector<1x1x1xf32>
      %34 = vector.extract %33[0, 0, 0] : f32 from vector<1x1x1xf32>
      %cst_16 = arith.constant 5.000000e-02 : f32
      %cst_17 = arith.constant 3.125000e-02 : f32
      %35 = arith.mulf %cst_16, %cst_17 : f32
      %cst_18 = arith.constant 3.125000e-02 : f32
      %36 = arith.mulf %35, %cst_18 : f32
      %37 = arith.mulf %36, %24 : f32
      %cst_19 = arith.constant 0.949999988 : f32
      %cst_20 = arith.constant 3.125000e-02 : f32
      %38 = arith.mulf %cst_19, %cst_20 : f32
      %cst_21 = arith.constant 3.125000e-02 : f32
      %39 = arith.mulf %38, %cst_21 : f32
      %40 = arith.mulf %39, %29 : f32
      %41 = arith.addf %37, %40 : f32
      %cst_22 = arith.constant 2.000000e+00 : f32
      %cst_23 = arith.constant 3.125000e-02 : f32
      %42 = arith.mulf %cst_22, %cst_23 : f32
      %43 = arith.mulf %42, %34 : f32
      %44 = arith.subf %41, %43 : f32
      %cst_24 = arith.constant 1.280000e+02 : f32
      %45 = arith.addf %44, %cst_24 : f32
      %cst_25 = arith.constant 2.048000e+03 : f32
      %46 = arith.divf %45, %cst_25 : f32
      %47 = tpu.iota {dimensions = array<i32: 1>} : vector<1x128xi32>
      %c0_i32_26 = arith.constant 0 : i32
      %48 = vector.broadcast %c0_i32_26 : i32 to vector<1x128xi32>
      %49 = arith.cmpi eq, %47, %48 : vector<1x128xi32>
      %cst_27 = arith.constant 0.000000e+00 : f32
      %50 = vector.broadcast %46 : f32 to vector<1x128xf32>
      %51 = vector.broadcast %cst_27 : f32 to vector<1x128xf32>
      %52 = arith.select %49, %50, %51 : vector<1x128xi1>, vector<1x128xf32>
      %c0_28 = arith.constant 0 : index
      %c0_29 = arith.constant 0 : index
      %53 = vector.load %arg4[%c0_28, %c0_29] : memref<1x128xf32, #tpu.memory_space<vmem>>, vector<1x128xf32>
      tpu.vector_store %arg4[%c0_28, %c0_29], %52 {strides = array<i32>} : memref<1x128xf32, #tpu.memory_space<vmem>>, vector<1x128xf32>,
    } else {
    }
    return
  }
  func.func @transform_0(%arg0: i32, %arg1: i32) -> (i32, i32) {
    %c0_i32 = arith.constant 0 : i32
    %c0_i32_0 = arith.constant 0 : i32
    return %arg1, %c0_i32 : i32, i32
  }
  func.func @transform_1(%arg0: i32, %arg1: i32) -> (i32, i32) {
    %c1_i32 = arith.constant 1 : i32
    %0 = arith.addi %arg1, %c1_i32 : i32
    %c0_i32 = arith.constant 0 : i32
    return %0, %arg0 : i32, i32
  }
  func.func @transform_2(%arg0: i32, %arg1: i32) -> (i32, i32) {
    %c0_i32 = arith.constant 0 : i32
    %c0_i32_0 = arith.constant 0 : i32
    return %c0_i32, %arg0 : i32, i32
  }
}

</mosaic_0001>

<llo_original>
// kernel: tpu_custom_call.1
$region0: #{tpu_custom_call.1}
  #allocation0 [shape = 'u32[]', space=smem, size = 0x4, offset = 0x4, fixed_abs, tag = 'smem constant byte address 0x4 - core index']
  #allocation1 [shape = 'u32[144,128]{1,0:T(1,128)}', space=vmem, size = 0x12000, scoped, tag = 'internal scratch']
  #allocation2 [shape = 'f32[128,128]{1,0:T(8,128)}', space=vmem, size = 0x10000, scoped, tag = 'scratch operand']
  %s0 = inlined_call_operand.hbm [shape: f32[32,128], index: 0, kind: input, shape index: {}]
  %s1 = inlined_call_operand.hbm [shape: f32[32,128], index: 1, kind: input, shape index: {}]
  %s2 = inlined_call_operand.hbm [shape: f32[1,128], index: 2, kind: output, shape index: {}]
  %s3 = sld [smem:[#allocation0]]
  $region34: #{tpu_custom_call.1} parent=0
    _
  %s5 = ssub.s32 1, %s3
  %s6 = scalar_select 0, %s5, %s3
  $region1: #{tpu_custom_call.1} parent=0
    #allocation3 [shape = 'u8[8192]{0}', space=vmem, size = 0x2000, scoped, tag = 'input window, operand 0, single buffered']
    #allocation4 [shape = 's32[1]{0}', space=sflag, size = 0x4, scoped, tag = 'scoped memory for tpu_custom_call.1']
    #allocation5 [shape = 's32[1]{0}', space=sflag, size = 0x4, scoped, tag = 'scoped memory for tpu_custom_call.1']
    #allocation6 [shape = 'u8[8192]{0}', space=vmem, size = 0x2000, scoped, tag = 'input window, operand 1, single buffered']
    #allocation7 [shape = 's32[1]{0}', space=sflag, size = 0x4, scoped, tag = 'scoped memory for tpu_custom_call.1']
    #allocation8 [shape = 'u8[512]{0}', space=vmem, size = 0x400, scoped, tag = 'output window, operand 0, single buffered']
    %7 = vsyncpa [#allocation4], 0
    %8 = vsyncpa [#allocation7], 0
    %9 = vsyncpa [#allocation5], 0
    // Predicated region
    $region2: #{tpu_custom_call.1} parent=1 // pred_check
      _
    $region3: #{tpu_custom_call.1} parent=1 // pred_check_branch
      %11 = sbr.rel (0) target = $region5
    $region4: #{tpu_custom_call.1} parent=1 // pred_region
      %s13 = ssub.s32 256, 256
      %14 = vsyncadd [#allocation4], %s13
      %s15 = sshll.u32 [#allocation3], 4
      %s16 = int_to_ptr.vmem [resolvable:$true] %s15
      %21 = dma.hbm_to_vmem [thread:$0]  %s0, 256, %s16, [#allocation4], 128, 128, 8
    $region5: #{tpu_custom_call.1} parent=1 // pred_fallthru
      _
    // Predicated region
    $region6: #{tpu_custom_call.1} parent=1 // pred_check
      _
    $region7: #{tpu_custom_call.1} parent=1 // pred_check_branch
      %23 = sbr.rel (0) target = $region9
    $region8: #{tpu_custom_call.1} parent=1 // pred_region
      %s24 = sadd.s32 0, 1
      %s25 = smul.u32 2, %s24
      %s27 = ssub.s32 256, 256
      %28 = vsyncadd [#allocation7], %s27
      %s29 = smul.addr %s25, 128
      %s30 = scalar_lea.hbm %s1, %s29
      %s31 = sshll.u32 [#allocation6], 4
      %s32 = int_to_ptr.vmem [resolvable:$true] %s31
      %37 = dma.hbm_to_vmem [thread:$0]  %s30, 256, %s32, [#allocation7], 128, 128, 8
    $region9: #{tpu_custom_call.1} parent=1 // pred_fallthru
      _
    // Predicated region
    $region10: #{tpu_custom_call.1} parent=1 // pred_check
      _
    $region11: #{tpu_custom_call.1} parent=1 // pred_check_branch
      %39 = sbr.rel (0) target = $region13
    $region12: #{tpu_custom_call.1} parent=1 // pred_region
      %40 = dma.done [#allocation4], 256
    $region13: #{tpu_custom_call.1} parent=1 // pred_fallthru
      _
    // Predicated region
    $region14: #{tpu_custom_call.1} parent=1 // pred_check
      _
    $region15: #{tpu_custom_call.1} parent=1 // pred_check_branch
      %42 = sbr.rel (0) target = $region17
    $region16: #{tpu_custom_call.1} parent=1 // pred_region
      %43 = dma.done [#allocation7], 256
    $region17: #{tpu_custom_call.1} parent=1 // pred_fallthru
      _
    %s44 = sadd.s32 0, 1
    %s45 = smul.u32 2, %s44
    %p46 = scmp.eq.s32.totalorder 0, 0
    // Predicated region
    $region18: #{tpu_custom_call.1} parent=1 // pred_check
      %p47 = pneg %p46
    $region19: #{tpu_custom_call.1} parent=1 // pred_check_branch
      %49 = sbr.rel (%p47) target = $region21
    $region20: #{tpu_custom_call.1} parent=1 // pred_region
      %50 = vst [vmem:[#allocation2] sm:$0xff] 0.0
      %51 = vst [vmem:[#allocation2 + $0x8] sm:$0xff] 0.0
      %52 = vst [vmem:[#allocation2 + $0x10] sm:$0xff] 0.0
      %53 = vst [vmem:[#allocation2 + $0x18] sm:$0xff] 0.0
      %54 = vst [vmem:[#allocation2 + $0x20] sm:$0xff] 0.0
      %55 = vst [vmem:[#allocation2 + $0x28] sm:$0xff] 0.0
      %56 = vst [vmem:[#allocation2 + $0x30] sm:$0xff] 0.0
      %57 = vst [vmem:[#allocation2 + $0x38] sm:$0xff] 0.0
      %58 = vst [vmem:[#allocation2 + $0x40] sm:$0xff] 0.0
      %59 = vst [vmem:[#allocation2 + $0x48] sm:$0xff] 0.0
      %60 = vst [vmem:[#allocation2 + $0x50] sm:$0xff] 0.0
      %61 = vst [vmem:[#allocation2 + $0x58] sm:$0xff] 0.0
      %62 = vst [vmem:[#allocation2 + $0x60] sm:$0xff] 0.0
      %63 = vst [vmem:[#allocation2 + $0x68] sm:$0xff] 0.0
      %64 = vst [vmem:[#allocation2 + $0x70] sm:$0xff] 0.0
      %65 = vst [vmem:[#allocation2 + $0x78] sm:$0xff] 0.0
    $region21: #{tpu_custom_call.1} parent=1 // pred_fallthru
      _
    %v66 = vld [vmem:[#allocation3] sm:$0xff]
    %v67 = vld [vmem:[#allocation3 + $0x8] sm:$0xff]
    %v68 = vld [vmem:[#allocation6] sm:$0xff]
    %v69 = vld [vmem:[#allocation6 + $0x8] sm:$0xff]
    %v70 = vld [vmem:[#allocation2] sm:$0xff]
    %v71 = vld [vmem:[#allocation2 + $0x8] sm:$0xff]
    %v72 = vld [vmem:[#allocation2 + $0x10] sm:$0xff]
    %v73 = vld [vmem:[#allocation2 + $0x18] sm:$0xff]
    %v74 = vld [vmem:[#allocation2 + $0x20] sm:$0xff]
    %v75 = vld [vmem:[#allocation2 + $0x28] sm:$0xff]
    %v76 = vld [vmem:[#allocation2 + $0x30] sm:$0xff]
    %v77 = vld [vmem:[#allocation2 + $0x38] sm:$0xff]
    %v78 = vld [vmem:[#allocation2 + $0x40] sm:$0xff]
    %v79 = vld [vmem:[#allocation2 + $0x48] sm:$0xff]
    %v80 = vld [vmem:[#allocation2 + $0x50] sm:$0xff]
    %v81 = vld [vmem:[#allocation2 + $0x58] sm:$0xff]
    %v82 = vld [vmem:[#allocation2 + $0x60] sm:$0xff]
    %v83 = vld [vmem:[#allocation2 + $0x68] sm:$0xff]
    %v84 = vld [vmem:[#allocation2 + $0x70] sm:$0xff]
    %v85 = vld [vmem:[#allocation2 + $0x78] sm:$0xff]
    %86 = vxpose.xlu0.b32.start [1/16] %v66, 128
    %87 = vxpose.xlu0.b32.cont [2/16] %v67, 128
    %88 = vxpose.xlu0.b32.cont [3/16] 0.0, 128
    %89 = vxpose.xlu0.b32.cont [4/16] 0.0, 128
    %90 = vxpose.xlu0.b32.cont [5/16] 0.0, 128
    %91 = vxpose.xlu0.b32.cont [6/16] 0.0, 128
    %92 = vxpose.xlu0.b32.cont [7/16] 0.0, 128
    %93 = vxpose.xlu0.b32.cont [8/16] 0.0, 128
    %94 = vxpose.xlu0.b32.cont [9/16] 0.0, 128
    %95 = vxpose.xlu0.b32.cont [10/16] 0.0, 128
    %96 = vxpose.xlu0.b32.cont [11/16] 0.0, 128
    %97 = vxpose.xlu0.b32.cont [12/16] 0.0, 128
    %98 = vxpose.xlu0.b32.cont [13/16] 0.0, 128
    %99 = vxpose.xlu0.b32.cont [14/16] 0.0, 128
    %100 = vxpose.xlu0.b32.cont [15/16] 0.0, 128
    %101 = vxpose.xlu0.b32.end [16/16] 0.0, 128
    %v102 = vpop.trf.xlu0
    %v103 = vpop.trf.xlu0
    %v104 = vpop.trf.xlu0
    %v105 = vpop.trf.xlu0
    %v106 = vpop.trf.xlu0
    %v107 = vpop.trf.xlu0
    %v108 = vpop.trf.xlu0
    %v109 = vpop.trf.xlu0
    %v110 = vpop.trf.xlu0
    %v111 = vpop.trf.xlu0
    %v112 = vpop.trf.xlu0
    %v113 = vpop.trf.xlu0
    %v114 = vpop.trf.xlu0
    %v115 = vpop.trf.xlu0
    %v116 = vpop.trf.xlu0
    %v117 = vpop.trf.xlu0
    %vm118 = vcmask 130048
    %v120 = vsel %vm118, %v102, 0
    %v123 = vsel %vm118, %v103, 0
    %v126 = vsel %vm118, %v104, 0
    %v129 = vsel %vm118, %v105, 0
    %v132 = vsel %vm118, %v106, 0
    %v135 = vsel %vm118, %v107, 0
    %v138 = vsel %vm118, %v108, 0
    %v141 = vsel %vm118, %v109, 0
    %v144 = vsel %vm118, %v110, 0
    %v147 = vsel %vm118, %v111, 0
    %v150 = vsel %vm118, %v112, 0
    %v153 = vsel %vm118, %v113, 0
    %v156 = vsel %vm118, %v114, 0
    %v159 = vsel %vm118, %v115, 0
    %v162 = vsel %vm118, %v116, 0
    %v165 = vsel %vm118, %v117, 0
    %167 = vmatprep.subr.mxu0 0.0
    %168 = vmatpush1.msra.mxu0 0.0
    %169 = vmatprep.subr.mxu0 0.0
    %170 = vmatpush1.msra.mxu0 0.0
    %171 = vmatprep.subr.mxu0 0.0
    %172 = vmatpush1.msra.mxu0 0.0
    %173 = vmatprep.subr.mxu0 0.0
    %174 = vmatpush1.msra.mxu0 0.0
    %175 = vmatprep.subr.mxu0 0.0
    %176 = vmatpush1.msra.mxu0 0.0
    %177 = vmatprep.subr.mxu0 0.0
    %178 = vmatpush1.msra.mxu0 0.0
    %179 = vmatprep.subr.mxu0 0.0
    %180 = vmatpush1.msra.mxu0 0.0
    %181 = vmatprep.subr.mxu0 0.0
    %182 = vmatpush1.msra.mxu0 0.0
    %183 = vmatprep.subr.mxu0 0.0
    %184 = vmatpush1.msra.mxu0 0.0
    %185 = vmatprep.subr.mxu0 0.0
    %186 = vmatpush1.msra.mxu0 0.0
    %187 = vmatprep.subr.mxu0 0.0
    %188 = vmatpush1.msra.mxu0 0.0
    %189 = vmatprep.subr.mxu0 0.0
    %190 = vmatpush1.msra.mxu0 0.0
    %191 = vmatprep.subr.mxu0 0.0
    %192 = vmatpush1.msra.mxu0 0.0
    %193 = vmatprep.subr.mxu0 0.0
    %194 = vmatpush1.msra.mxu0 0.0
    %195 = vmatprep.subr.mxu0 0.0
    %196 = vmatpush1.msra.mxu0 %v69
    %197 = vmatprep.subr.mxu0 0.0
    %198 = vmatpush1.msra.mxu0 %v68
    %199 = vmatprep.subr.mxu0 0.0
    %200 = vmatpush2.msra.mxu0 0.0
    %201 = vmatprep.subr.mxu0 0.0
    %202 = vmatpush2.msra.mxu0 0.0
    %203 = vmatprep.subr.mxu0 0.0
    %204 = vmatpush2.msra.mxu0 0.0
    %205 = vmatprep.subr.mxu0 0.0
    %206 = vmatpush2.msra.mxu0 0.0
    %207 = vmatprep.subr.mxu0 0.0
    %208 = vmatpush2.msra.mxu0 0.0
    %209 = vmatprep.subr.mxu0 0.0
    %210 = vmatpush2.msra.mxu0 0.0
    %211 = vmatprep.subr.mxu0 0.0
    %212 = vmatpush2.msra.mxu0 0.0
    %213 = vmatprep.subr.mxu0 0.0
    %214 = vmatpush2.msra.mxu0 0.0
    %215 = vmatprep.subr.mxu0 0.0
    %216 = vmatpush2.msra.mxu0 0.0
    %217 = vmatprep.subr.mxu0 0.0
    %218 = vmatpush2.msra.mxu0 0.0
    %219 = vmatprep.subr.mxu0 0.0
    %220 = vmatpush2.msra.mxu0 0.0
    %221 = vmatprep.subr.mxu0 0.0
    %222 = vmatpush2.msra.mxu0 0.0
    %223 = vmatprep.subr.mxu0 0.0
    %224 = vmatpush2.msra.mxu0 0.0
    %225 = vmatprep.subr.mxu0 0.0
    %226 = vmatpush2.msra.mxu0 0.0
    %227 = vmatprep.subr.mxu0 0.0
    %228 = vmatpush2.msra.mxu0 0.0
    %229 = vmatprep.subr.mxu0 0.0
    %230 = vmatpush2.msra.mxu0 0.0
    %231 = vmatprep.mubr.f32.mxu0 0.0
    %232 = vmatmul.mubr.f32.gmra.mxu0 %v120
    %v233 = vpop.f32.mrf.mxu0
    %v234 = vadd.f32 0.0, %v233
    %v235 = vpop.f32.mrf.mxu0
    %236 = vmatprep.mubr.f32.mxu0 0.0
    %237 = vmatmul.mubr.f32.gmra.mxu0 %v123
    %v238 = vpop.f32.mrf.mxu0
    %v239 = vadd.f32 0.0, %v238
    %v240 = vpop.f32.mrf.mxu0
    %241 = vmatprep.mubr.f32.mxu0 0.0
    %242 = vmatmul.mubr.f32.gmra.mxu0 %v126
    %v243 = vpop.f32.mrf.mxu0
    %v244 = vadd.f32 0.0, %v243
    %v245 = vpop.f32.mrf.mxu0
    %246 = vmatprep.mubr.f32.mxu0 0.0
    %247 = vmatmul.mubr.f32.gmra.mxu0 %v129
    %v248 = vpop.f32.mrf.mxu0
    %v249 = vadd.f32 0.0, %v248
    %v250 = vpop.f32.mrf.mxu0
    %251 = vmatprep.mubr.f32.mxu0 0.0
    %252 = vmatmul.mubr.f32.gmra.mxu0 %v132
    %v253 = vpop.f32.mrf.mxu0
    %v254 = vadd.f32 0.0, %v253
    %v255 = vpop.f32.mrf.mxu0
    %256 = vmatprep.mubr.f32.mxu0 0.0
    %257 = vmatmul.mubr.f32.gmra.mxu0 %v135
    %v258 = vpop.f32.mrf.mxu0
    %v259 = vadd.f32 0.0, %v258
    %v260 = vpop.f32.mrf.mxu0
    %261 = vmatprep.mubr.f32.mxu0 0.0
    %262 = vmatmul.mubr.f32.gmra.mxu0 %v138
    %v263 = vpop.f32.mrf.mxu0
    %v264 = vadd.f32 0.0, %v263
    %v265 = vpop.f32.mrf.mxu0
    %266 = vmatprep.mubr.f32.mxu0 0.0
    %267 = vmatmul.mubr.f32.gmra.mxu0 %v141
    %v268 = vpop.f32.mrf.mxu0
    %v269 = vadd.f32 0.0, %v268
    %v270 = vpop.f32.mrf.mxu0
    %271 = vmatprep.mubr.f32.mxu0 0.0
    %272 = vmatmul.mubr.f32.gmra.mxu0 %v144
    %v273 = vpop.f32.mrf.mxu0
    %v274 = vadd.f32 0.0, %v273
    %v275 = vpop.f32.mrf.mxu0
    %276 = vmatprep.mubr.f32.mxu0 0.0
    %277 = vmatmul.mubr.f32.gmra.mxu0 %v147
    %v278 = vpop.f32.mrf.mxu0
    %v279 = vadd.f32 0.0, %v278
    %v280 = vpop.f32.mrf.mxu0
    %281 = vmatprep.mubr.f32.mxu0 0.0
    %282 = vmatmul.mubr.f32.gmra.mxu0 %v150
    %v283 = vpop.f32.mrf.mxu0
    %v284 = vadd.f32 0.0, %v283
    %v285 = vpop.f32.mrf.mxu0
    %286 = vmatprep.mubr.f32.mxu0 0.0
    %287 = vmatmul.mubr.f32.gmra.mxu0 %v153
    %v288 = vpop.f32.mrf.mxu0
    %v289 = vadd.f32 0.0, %v288
    %v290 = vpop.f32.mrf.mxu0
    %291 = vmatprep.mubr.f32.mxu0 0.0
    %292 = vmatmul.mubr.f32.gmra.mxu0 %v156
    %v293 = vpop.f32.mrf.mxu0
    %v294 = vadd.f32 0.0, %v293
    %v295 = vpop.f32.mrf.mxu0
    %296 = vmatprep.mubr.f32.mxu0 0.0
    %297 = vmatmul.mubr.f32.gmra.mxu0 %v159
    %v298 = vpop.f32.mrf.mxu0
    %v299 = vadd.f32 0.0, %v298
    %v300 = vpop.f32.mrf.mxu0
    %301 = vmatprep.mubr.f32.mxu0 0.0
    %302 = vmatmul.mubr.f32.gmra.mxu0 %v162
    %v303 = vpop.f32.mrf.mxu0
    %v304 = vadd.f32 0.0, %v303
    %v305 = vpop.f32.mrf.mxu0
    %306 = vmatprep.mubr.f32.mxu0 0.0
    %307 = vmatmul.mubr.f32.gmra.mxu0 %v165
    %v308 = vpop.f32.mrf.mxu0
    %v309 = vadd.f32 0.0, %v308
    %v310 = vpop.f32.mrf.mxu0
    %311 = vdwg.mxu0
    %v312 = vadd.f32 %v70, %v234
    %v313 = vadd.f32 %v71, %v239
    %v314 = vadd.f32 %v72, %v244
    %v315 = vadd.f32 %v73, %v249
    %v316 = vadd.f32 %v74, %v254
    %v317 = vadd.f32 %v75, %v259
    %v318 = vadd.f32 %v76, %v264
    %v319 = vadd.f32 %v77, %v269
    %v320 = vadd.f32 %v78, %v274
    %v321 = vadd.f32 %v79, %v279
    %v322 = vadd.f32 %v80, %v284
    %v323 = vadd.f32 %v81, %v289
    %v324 = vadd.f32 %v82, %v294
    %v325 = vadd.f32 %v83, %v299
    %v326 = vadd.f32 %v84, %v304
    %v327 = vadd.f32 %v85, %v309
    %328 = vst [vmem:[#allocation2] sm:$0xff] %v312
    %329 = vst [vmem:[#allocation2 + $0x8] sm:$0xff] %v313
    %330 = vst [vmem:[#allocation2 + $0x10] sm:$0xff] %v314
    %331 = vst [vmem:[#allocation2 + $0x18] sm:$0xff] %v315
    %332 = vst [vmem:[#allocation2 + $0x20] sm:$0xff] %v316
    %333 = vst [vmem:[#allocation2 + $0x28] sm:$0xff] %v317
    %334 = vst [vmem:[#allocation2 + $0x30] sm:$0xff] %v318
    %335 = vst [vmem:[#allocation2 + $0x38] sm:$0xff] %v319
    %336 = vst [vmem:[#allocation2 + $0x40] sm:$0xff] %v320
    %337 = vst [vmem:[#allocation2 + $0x48] sm:$0xff] %v321
    %338 = vst [vmem:[#allocation2 + $0x50] sm:$0xff] %v322
    %339 = vst [vmem:[#allocation2 + $0x58] sm:$0xff] %v323
    %340 = vst [vmem:[#allocation2 + $0x60] sm:$0xff] %v324
    %341 = vst [vmem:[#allocation2 + $0x68] sm:$0xff] %v325
    %342 = vst [vmem:[#allocation2 + $0x70] sm:$0xff] %v326
    %343 = vst [vmem:[#allocation2 + $0x78] sm:$0xff] %v327
    // Predicated region
    $region22: #{tpu_custom_call.1} parent=1 // pred_check
      %p344 = pneg %p46
    $region23: #{tpu_custom_call.1} parent=1 // pred_check_branch
      %346 = sbr.rel (%p344) target = $region25
    $region24: #{tpu_custom_call.1} parent=1 // pred_region
      %v347 = vld [vmem:[#allocation2] sm:$0xff]
      %v348 = vld [vmem:[#allocation2 + $0x8] sm:$0xff]
      %v349 = vld [vmem:[#allocation2 + $0x10] sm:$0xff]
      %v350 = vld [vmem:[#allocation2 + $0x18] sm:$0xff]
      %v351 = vld [vmem:[#allocation2 + $0x20] sm:$0xff]
      %v352 = vld [vmem:[#allocation2 + $0x28] sm:$0xff]
      %v353 = vld [vmem:[#allocation2 + $0x30] sm:$0xff]
      %v354 = vld [vmem:[#allocation2 + $0x38] sm:$0xff]
      %v355 = vld [vmem:[#allocation2 + $0x40] sm:$0xff]
      %v356 = vld [vmem:[#allocation2 + $0x48] sm:$0xff]
      %v357 = vld [vmem:[#allocation2 + $0x50] sm:$0xff]
      %v358 = vld [vmem:[#allocation2 + $0x58] sm:$0xff]
      %v359 = vld [vmem:[#allocation2 + $0x60] sm:$0xff]
      %v360 = vld [vmem:[#allocation2 + $0x68] sm:$0xff]
      %v361 = vld [vmem:[#allocation2 + $0x70] sm:$0xff]
      %v362 = vld [vmem:[#allocation2 + $0x78] sm:$0xff]
      %v363 = vmul.f32 %v347, %v347
      %v364 = vmul.f32 %v348, %v348
      %v365 = vmul.f32 %v349, %v349
      %v366 = vmul.f32 %v350, %v350
      %v367 = vmul.f32 %v351, %v351
      %v368 = vmul.f32 %v352, %v352
      %v369 = vmul.f32 %v353, %v353
      %v370 = vmul.f32 %v354, %v354
      %v371 = vmul.f32 %v355, %v355
      %v372 = vmul.f32 %v356, %v356
      %v373 = vmul.f32 %v357, %v357
      %v374 = vmul.f32 %v358, %v358
      %v375 = vmul.f32 %v359, %v359
      %v376 = vmul.f32 %v360, %v360
      %v377 = vmul.f32 %v361, %v361
      %v378 = vmul.f32 %v362, %v362
      %v379 = vlaneseq
      %v380 = vshrl.u32 %v379, 7
      %v381 = vadd.s32 %v380, 8
      %v382 = vadd.s32 %v380, 16
      %v383 = vadd.s32 %v380, 24
      %v384 = vadd.s32 %v380, 32
      %v385 = vadd.s32 %v380, 40
      %v386 = vadd.s32 %v380, 48
      %v387 = vadd.s32 %v380, 56
      %v388 = vadd.s32 %v380, 64
      %v389 = vadd.s32 %v380, 72
      %v390 = vadd.s32 %v380, 80
      %v391 = vadd.s32 %v380, 88
      %v392 = vadd.s32 %v380, 96
      %v393 = vadd.s32 %v380, 104
      %v394 = vadd.s32 %v380, 112
      %v395 = vadd.s32 %v380, 120
      %v396 = vlaneseq
      %v397 = vand.u32 %v396, 127
      %s398 = smul.u32 0, 128
      %v399 = vstv %s398
      %v400 = vadd.s32 %v397, %v399
      %vm401 = vcmp.eq.s32.totalorder %v380, %v400
      %vm402 = vcmp.eq.s32.totalorder %v381, %v400
      %vm403 = vcmp.eq.s32.totalorder %v382, %v400
      %vm404 = vcmp.eq.s32.totalorder %v383, %v400
      %vm405 = vcmp.eq.s32.totalorder %v384, %v400
      %vm406 = vcmp.eq.s32.totalorder %v385, %v400
      %vm407 = vcmp.eq.s32.totalorder %v386, %v400
      %vm408 = vcmp.eq.s32.totalorder %v387, %v400
      %vm409 = vcmp.eq.s32.totalorder %v388, %v400
      %vm410 = vcmp.eq.s32.totalorder %v389, %v400
      %vm411 = vcmp.eq.s32.totalorder %v390, %v400
      %vm412 = vcmp.eq.s32.totalorder %v391, %v400
      %vm413 = vcmp.eq.s32.totalorder %v392, %v400
      %vm414 = vcmp.eq.s32.totalorder %v393, %v400
      %vm415 = vcmp.eq.s32.totalorder %v394, %v400
      %vm416 = vcmp.eq.s32.totalorder %v395, %v400
      %v417 = vadd.f32 %v363, %v364
      %v418 = vadd.f32 %v417, %v365
      %v419 = vadd.f32 %v418, %v366
      %v420 = vadd.f32 %v419, %v367
      %v421 = vadd.f32 %v420, %v368
      %v422 = vadd.f32 %v421, %v369
      %v423 = vadd.f32 %v422, %v370
      %v424 = vadd.f32 %v423, %v371
      %v425 = vadd.f32 %v424, %v372
      %v426 = vadd.f32 %v425, %v373
      %v427 = vadd.f32 %v426, %v374
      %v428 = vadd.f32 %v427, %v375
      %v429 = vadd.f32 %v428, %v376
      %v430 = vadd.f32 %v429, %v377
      %v431 = vadd.f32 %v430, %v378
      %432 = vadd.xlane.f32.xlu0 %v431
      %v433 = vpop.xlane.xlu0 %432
      %v434 = vrot.slane %v433, 4
      %v435 = vadd.f32 %v433, %v434
      %v436 = vrot.slane %v435, 2
      %v437 = vadd.f32 %v435, %v436
      %v438 = vrot.slane %v437, 1
      %v439 = vadd.f32 %v437, %v438
      %s440 = vtos %v439
      %v441 = vsel %vm401, %v363, 0.0
      %v442 = vsel %vm402, %v364, 0.0
      %v443 = vsel %vm403, %v365, 0.0
      %v444 = vsel %vm404, %v366, 0.0
      %v445 = vsel %vm405, %v367, 0.0
      %v446 = vsel %vm406, %v368, 0.0
      %v447 = vsel %vm407, %v369, 0.0
      %v448 = vsel %vm408, %v370, 0.0
      %v449 = vsel %vm409, %v371, 0.0
      %v450 = vsel %vm410, %v372, 0.0
      %v451 = vsel %vm411, %v373, 0.0
      %v452 = vsel %vm412, %v374, 0.0
      %v453 = vsel %vm413, %v375, 0.0
      %v454 = vsel %vm414, %v376, 0.0
      %v455 = vsel %vm415, %v377, 0.0
      %v456 = vsel %vm416, %v378, 0.0
      %v457 = vadd.f32 %v441, %v442
      %v458 = vadd.f32 %v457, %v443
      %v459 = vadd.f32 %v458, %v444
      %v460 = vadd.f32 %v459, %v445
      %v461 = vadd.f32 %v460, %v446
      %v462 = vadd.f32 %v461, %v447
      %v463 = vadd.f32 %v462, %v448
      %v464 = vadd.f32 %v463, %v449
      %v465 = vadd.f32 %v464, %v450
      %v466 = vadd.f32 %v465, %v451
      %v467 = vadd.f32 %v466, %v452
      %v468 = vadd.f32 %v467, %v453
      %v469 = vadd.f32 %v468, %v454
      %v470 = vadd.f32 %v469, %v455
      %v471 = vadd.f32 %v470, %v456
      %472 = vadd.xlane.f32.xlu0 %v471
      %v473 = vpop.xlane.xlu0 %472
      %v474 = vrot.slane %v473, 4
      %v475 = vadd.f32 %v473, %v474
      %v476 = vrot.slane %v475, 2
      %v477 = vadd.f32 %v475, %v476
      %v478 = vrot.slane %v477, 1
      %v479 = vadd.f32 %v477, %v478
      %s480 = vtos %v479
      %v481 = vsel %vm401, %v347, 0.0
      %v482 = vsel %vm402, %v348, 0.0
      %v483 = vsel %vm403, %v349, 0.0
      %v484 = vsel %vm404, %v350, 0.0
      %v485 = vsel %vm405, %v351, 0.0
      %v486 = vsel %vm406, %v352, 0.0
      %v487 = vsel %vm407, %v353, 0.0
      %v488 = vsel %vm408, %v354, 0.0
      %v489 = vsel %vm409, %v355, 0.0
      %v490 = vsel %vm410, %v356, 0.0
      %v491 = vsel %vm411, %v357, 0.0
      %v492 = vsel %vm412, %v358, 0.0
      %v493 = vsel %vm413, %v359, 0.0
      %v494 = vsel %vm414, %v360, 0.0
      %v495 = vsel %vm415, %v361, 0.0
      %v496 = vsel %vm416, %v362, 0.0
      %v497 = vadd.f32 %v481, %v482
      %v498 = vadd.f32 %v497, %v483
      %v499 = vadd.f32 %v498, %v484
      %v500 = vadd.f32 %v499, %v485
      %v501 = vadd.f32 %v500, %v486
      %v502 = vadd.f32 %v501, %v487
      %v503 = vadd.f32 %v502, %v488
      %v504 = vadd.f32 %v503, %v489
      %v505 = vadd.f32 %v504, %v490
      %v506 = vadd.f32 %v505, %v491
      %v507 = vadd.f32 %v506, %v492
      %v508 = vadd.f32 %v507, %v493
      %v509 = vadd.f32 %v508, %v494
      %v510 = vadd.f32 %v509, %v495
      %v511 = vadd.f32 %v510, %v496
      %512 = vadd.xlane.f32.xlu0 %v511
      %v513 = vpop.xlane.xlu0 %512
      %v514 = vrot.slane %v513, 4
      %v515 = vadd.f32 %v513, %v514
      %v516 = vrot.slane %v515, 2
      %v517 = vadd.f32 %v515, %v516
      %v518 = vrot.slane %v517, 1
      %v519 = vadd.f32 %v517, %v518
      %s520 = vtos %v519
      %s521 = smul.f32 %s440, 4.8828126e-05
      %s522 = smul.f32 %s480, 0.00092773436
      %s523 = sadd.f32 %s521, %s522
      %s524 = smul.f32 %s520, 0.0625
      %s525 = ssub.f32 %s523, %s524
      %s526 = sadd.f32 %s525, 128.0
      %v527 = vrcp.pop 2048.0
      %s528 = vtos %v527
      %s529 = smul.f32 %s526, %s528
      %vm530 = vcmp.eq.s32.totalorder %v397, 0
      %v531 = vstv %s529
      %v532 = vsel %vm530, %v531, 0.0
      %533 = vst [vmem:[#allocation8] sm:$0x1] %v532
    $region25: #{tpu_custom_call.1} parent=1 // pred_fallthru
      _
    // Predicated region
    $region26: #{tpu_custom_call.1} parent=1 // pred_check
      _
    $region27: #{tpu_custom_call.1} parent=1 // pred_check_branch
      %535 = sbr.rel (0) target = $region29
    $region28: #{tpu_custom_call.1} parent=1 // pred_region
      %s537 = ssub.s32 16, 16
      %538 = vsyncadd [#allocation5], %s537
      %s540 = sshll.u32 [#allocation8], 4
      %s541 = int_to_ptr.vmem [resolvable:$true] %s540
      %543 = dma.vmem_to_hbm [thread:$0]  %s541, 16, %s2, [#allocation5]
    $region29: #{tpu_custom_call.1} parent=1 // pred_fallthru
      _
    // Predicated region
    $region30: #{tpu_custom_call.1} parent=1 // pred_check
      _
    $region31: #{tpu_custom_call.1} parent=1 // pred_check_branch
      %545 = sbr.rel (0) target = $region33
    $region32: #{tpu_custom_call.1} parent=1 // pred_region
      %546 = dma.done [#allocation5], 16
    $region33: #{tpu_custom_call.1} parent=1 // pred_fallthru
      _
    %547 = vsyncpa [#allocation4], 1
    %548 = vsyncpa [#allocation7], 1
    %549 = vsyncpa [#allocation5], 1

</llo_original>
